<compile_context>
chip_gen: v7x
topology: tpu7x:2x2x1
jax: 0.10.0
libtpu: 0.0.40
codegen_flags: <defaults>
</compile_context>

<pallas_src>
import math

import jax
import jax.numpy as jnp
from jax.experimental import pallas as pl
from jax.experimental.pallas import tpu as pltpu


_TILE_BYTES = 4 * 1024 * 1024      # per-buffer tile budget (x + out, double-buffered ~16 MiB)
_VMEM_LIMIT = 32 * 1024 * 1024     # explicit scoped-VMEM limit; safe on v5e/v6e/v7x


def _pick_row_tile(rows, cols, itemsize):
    """Largest row-tile (multiple of 8, or the full `rows`) whose tile fits the budget."""
    max_rows = max(1, _TILE_BYTES // max(1, cols * itemsize))
    if max_rows >= rows:
        return rows                      # whole array in a single block
    tn = (max_rows // 8) * 8
    return max(tn, 8)


def _add_colbias_kernel(x_ref, b_ref, o_ref):
    # x: (TN, cols), b: (1, cols) resident -> broadcast over rows.
    o_ref[...] = x_ref[...] + b_ref[...]


def _add_rowbias_kernel(x_ref, b_ref, o_ref):
    # x: (TN, cols), b: (TN, 1) -> broadcast over columns.
    o_ref[...] = x_ref[...] + b_ref[...]


def _tiled_add_colbias(x2d, bias_row):
    """x2d: (rows, cols) + bias_row: (1, cols), tiled over rows."""
    rows, cols = x2d.shape
    tn = _pick_row_tile(rows, cols, x2d.dtype.itemsize)
    return pl.pallas_call(
        _add_colbias_kernel,
        grid=(pl.cdiv(rows, tn),),
        out_shape=jax.ShapeDtypeStruct((rows, cols), x2d.dtype),
        in_specs=[
            pl.BlockSpec((tn, cols), lambda i: (i, 0)),
            pl.BlockSpec((1, cols), lambda i: (0, 0)),   # bias stays resident
        ],
        out_specs=pl.BlockSpec((tn, cols), lambda i: (i, 0)),
        compiler_params=pltpu.CompilerParams(
            dimension_semantics=("parallel",),
            vmem_limit_bytes=_VMEM_LIMIT,
        ),
    )(x2d, bias_row)


def _tiled_add_rowbias(x2d, bias_col):
    """x2d: (rows, cols) + bias_col: (rows, 1), tiled over rows."""
    rows, cols = x2d.shape
    tn = _pick_row_tile(rows, cols, x2d.dtype.itemsize)
    return pl.pallas_call(
        _add_rowbias_kernel,
        grid=(pl.cdiv(rows, tn),),
        out_shape=jax.ShapeDtypeStruct((rows, cols), x2d.dtype),
        in_specs=[
            pl.BlockSpec((tn, cols), lambda i: (i, 0)),
            pl.BlockSpec((tn, 1), lambda i: (i, 0)),     # tiny (tn*4 B) per-step slice
        ],
        out_specs=pl.BlockSpec((tn, cols), lambda i: (i, 0)),
        compiler_params=pltpu.CompilerParams(
            dimension_semantics=("parallel",),
            vmem_limit_bytes=_VMEM_LIMIT,
        ),
    )(x2d, bias_col)


def add_bias(x, bias_param):
    """Pallas AddBias forward.

    bias_param has shape (C, 1), mirroring nn.Parameter(bias.unsqueeze(1)).
    """
    C = bias_param.shape[0]
    bias_flat = bias_param.reshape(C).astype(x.dtype)

    if x.ndim == 2:
        N, Cx = x.shape
        assert Cx == C
        # Lane-density fold: (N, C) -> (N//R, R*C) with R*C a multiple of 128,
        # bias tiled R times. Only when N folds evenly (else rows get wrong bias).
        if C < 128:
            R = 128 // math.gcd(C, 128)
            if N >= R and N % R == 0:
                xf = x.reshape(N // R, R * C)
                bias_row = jnp.tile(bias_flat, R).reshape(1, R * C)
                return _tiled_add_colbias(xf, bias_row).reshape(N, C)
        # Fallback: plain (N, C) tiling over rows with resident (1, C) bias.
        return _tiled_add_colbias(x, bias_flat.reshape(1, C))

    elif x.ndim == 4:
        N, Cx, H, W = x.shape
        assert Cx == C
        # Lane-dense layout: (N, C, H, W) -> (N*C, H*W); bias becomes per-row.
        xf = x.reshape(N * C, H * W)
        bias_col = jnp.tile(bias_flat, N).reshape(N * C, 1)
        return _tiled_add_rowbias(xf, bias_col).reshape(N, C, H, W)

    else:
        raise ValueError("AddBias expects a 2D or 4D input")


def _ref_add_bias(x, bias_param):
    if x.ndim == 2:
        return x + bias_param.reshape(1, -1)
    return x + bias_param.reshape(1, -1, 1, 1)


if __name__ == "__main__":
    key = jax.random.PRNGKey(0)
    k_bias, k_x4, k_x2, k_x2f = jax.random.split(key, 4)

    C = 4
    # Deterministic "parameter": matches AddBias.__init__(bias) with a 1-D bias
    # of length C; stored as (C, 1) like bias.unsqueeze(1).
    bias = jax.random.normal(k_bias, (C,), dtype=jnp.float32)
    bias_param = bias[:, None]  # (C, 1)

    # 4D path (conv feature maps, NCHW) -> lane-dense (N*C, H*W) kernel.
    x4 = jax.random.normal(k_x4, (2, C, 16, 16), dtype=jnp.float32)
    y4 = jax.block_until_ready(add_bias(x4, bias_param))
    assert y4.shape == x4.shape and y4.dtype == x4.dtype
    assert jnp.allclose(y4, _ref_add_bias(x4, bias_param), atol=1e-6)

    # 2D path, small N (fold not applicable -> plain tiled path).
    x2 = jax.random.normal(k_x2, (2, C), dtype=jnp.float32)
    y2 = jax.block_until_ready(add_bias(x2, bias_param))
    assert y2.shape == x2.shape and y2.dtype == x2.dtype
    assert jnp.allclose(y2, _ref_add_bias(x2, bias_param), atol=1e-6)

    # 2D path exercising the lane-density fold (N=64, C=4 -> (2, 128) slab).
    x2f = jax.random.normal(k_x2f, (64, C), dtype=jnp.float32)
    y2f = jax.block_until_ready(add_bias(x2f, bias_param))
    assert y2f.shape == x2f.shape and y2f.dtype == x2f.dtype
    assert jnp.allclose(y2f, _ref_add_bias(x2f, bias_param), atol=1e-6)

    print("KERNEL_OK")
</pallas_src>

<mosaic_0001>
module attributes {stable_mosaic.version = 11 : i64} {
  func.func @_add_rowbias_kernel(%arg0: i32, %arg1: memref<8x256xf32, #tpu.memory_space<vmem>>, %arg2: memref<8x1xf32, #tpu.memory_space<vmem>>, %arg3: memref<8x256xf32, #tpu.memory_space<vmem>>) attributes {dimension_semantics = [#tpu.dimension_semantics<parallel>], iteration_bounds = array<i64: 1>, scalar_prefetch = 0 : i64, scratch_operands = 0 : i64, tpu.core_type = #tpu.core_type<tc>, window_params = [{transform_indices = @transform_0, window_bounds = array<i64: 8, 256>}, {transform_indices = @transform_1, window_bounds = array<i64: 8, 1>}, {transform_indices = @transform_2, window_bounds = array<i64: 8, 256>}]} {
    %c0 = arith.constant 0 : index
    %c0_0 = arith.constant 0 : index
    %0 = vector.load %arg1[%c0, %c0_0] : memref<8x256xf32, #tpu.memory_space<vmem>>, vector<8x256xf32>
    %c0_1 = arith.constant 0 : index
    %c0_2 = arith.constant 0 : index
    %1 = vector.load %arg2[%c0_1, %c0_2] : memref<8x1xf32, #tpu.memory_space<vmem>>, vector<8x1xf32>
    %2 = vector.broadcast %1 : vector<8x1xf32> to vector<8x256xf32>
    %3 = arith.addf %0, %2 : vector<8x256xf32>
    %c0_3 = arith.constant 0 : index
    %c0_4 = arith.constant 0 : index
    %4 = vector.load %arg3[%c0_3, %c0_4] : memref<8x256xf32, #tpu.memory_space<vmem>>, vector<8x256xf32>
    tpu.vector_store %arg3[%c0_3, %c0_4], %3 {strides = array<i32>} : memref<8x256xf32, #tpu.memory_space<vmem>>, vector<8x256xf32>,
    return
  }
  func.func @transform_0(%arg0: i32) -> (i32, i32) {
    %c0_i32 = arith.constant 0 : i32
    %c0_i32_0 = arith.constant 0 : i32
    return %arg0, %c0_i32 : i32, i32
  }
  func.func @transform_1(%arg0: i32) -> (i32, i32) {
    %c0_i32 = arith.constant 0 : i32
    %c0_i32_0 = arith.constant 0 : i32
    return %arg0, %c0_i32 : i32, i32
  }
  func.func @transform_2(%arg0: i32) -> (i32, i32) {
    %c0_i32 = arith.constant 0 : i32
    %c0_i32_0 = arith.constant 0 : i32
    return %arg0, %c0_i32 : i32, i32
  }
}

</mosaic_0001>

<llo_original>
// kernel: tpu_custom_call.1
$region0: #{tpu_custom_call.1}
  #allocation0 [shape = 'u32[]', space=smem, size = 0x4, offset = 0x4, fixed_abs, tag = 'smem constant byte address 0x4 - core index']
  #allocation1 [shape = 'u32[144,128]{1,0:T(1,128)}', space=vmem, size = 0x12000, scoped, tag = 'internal scratch']
  %s0 = inlined_call_operand.hbm [shape: f32[8,256], index: 0, kind: input, shape index: {}]
  %s1 = inlined_call_operand.vmem [shape: f32[8,1], index: 1, kind: input, shape index: {}]
  %s2 = inlined_call_operand.hbm [shape: f32[8,256], index: 2, kind: output, shape index: {}]
  %s3 = sld [smem:[#allocation0]]
  $region22: #{tpu_custom_call.1} parent=0
    _
  %s5 = ssub.s32 1, %s3
  %s6 = scalar_select 0, %s5, %s3
  $region1: #{tpu_custom_call.1} parent=0
    #allocation2 [shape = 'u8[8192]{0}', space=vmem, size = 0x2000, scoped, tag = 'input window, operand 0, single buffered']
    #allocation3 [shape = 's32[1]{0}', space=sflag, size = 0x4, scoped, tag = 'scoped memory for tpu_custom_call.1']
    #allocation4 [shape = 's32[1]{0}', space=sflag, size = 0x4, scoped, tag = 'scoped memory for tpu_custom_call.1']
    #allocation5 [shape = 'u8[8192]{0}', space=vmem, size = 0x2000, scoped, tag = 'output window, operand 0, single buffered']
    %7 = vsyncpa [#allocation3], 0
    %8 = vsyncpa [#allocation4], 0
    // Predicated region
    $region2: #{tpu_custom_call.1} parent=1 // pred_check
      _
    $region3: #{tpu_custom_call.1} parent=1 // pred_check_branch
      %10 = sbr.rel (0) target = $region5
    $region4: #{tpu_custom_call.1} parent=1 // pred_region
      %s12 = ssub.s32 256, 256
      %13 = vsyncadd [#allocation3], %s12
      %s15 = sshll.u32 [#allocation2], 4
      %s16 = int_to_ptr.vmem [resolvable:$true] %s15
      %18 = dma.hbm_to_vmem [thread:$0]  %s0, 256, %s16, [#allocation3]
    $region5: #{tpu_custom_call.1} parent=1 // pred_fallthru
      _
    // Predicated region
    $region6: #{tpu_custom_call.1} parent=1 // pred_check
      _
    $region7: #{tpu_custom_call.1} parent=1 // pred_check_branch
      %20 = sbr.rel (0) target = $region9
    $region8: #{tpu_custom_call.1} parent=1 // pred_region
      _
    $region9: #{tpu_custom_call.1} parent=1 // pred_fallthru
      _
    // Predicated region
    $region10: #{tpu_custom_call.1} parent=1 // pred_check
      _
    $region11: #{tpu_custom_call.1} parent=1 // pred_check_branch
      %22 = sbr.rel (0) target = $region13
    $region12: #{tpu_custom_call.1} parent=1 // pred_region
      %23 = dma.done [#allocation3], 256
    $region13: #{tpu_custom_call.1} parent=1 // pred_fallthru
      _
    %v24 = vld [vmem:[#allocation2] sm:$0xff]
    %v25 = vld [vmem:[#allocation2 + $0x8] sm:$0xff]
    %v26 = vld [vmem:[%s1] sm:$0xff]
    %28 = vset.pattern.permute.xlu0 0
    %29 = vperm.xlu0 %28, %v26
    %v30 = vpop.permute.xlu0 %29
    %v32 = vadd.f32 %v24, %v30
    %v33 = vadd.f32 %v25, %v30
    %34 = vst [vmem:[#allocation5] sm:$0xff] %v32
    %35 = vst [vmem:[#allocation5 + $0x8] sm:$0xff] %v33
    // Predicated region
    $region14: #{tpu_custom_call.1} parent=1 // pred_check
      _
    $region15: #{tpu_custom_call.1} parent=1 // pred_check_branch
      %37 = sbr.rel (0) target = $region17
    $region16: #{tpu_custom_call.1} parent=1 // pred_region
      %s39 = ssub.s32 256, 256
      %40 = vsyncadd [#allocation4], %s39
      %s42 = sshll.u32 [#allocation5], 4
      %s43 = int_to_ptr.vmem [resolvable:$true] %s42
      %45 = dma.vmem_to_hbm [thread:$0]  %s43, 256, %s2, [#allocation4]
    $region17: #{tpu_custom_call.1} parent=1 // pred_fallthru
      _
    // Predicated region
    $region18: #{tpu_custom_call.1} parent=1 // pred_check
      _
    $region19: #{tpu_custom_call.1} parent=1 // pred_check_branch
      %47 = sbr.rel (0) target = $region21
    $region20: #{tpu_custom_call.1} parent=1 // pred_region
      %48 = dma.done [#allocation4], 256
    $region21: #{tpu_custom_call.1} parent=1 // pred_fallthru
      _
    %49 = vsyncpa [#allocation3], 1
    %50 = vsyncpa [#allocation4], 1

</llo_original>
